<compile_context>
chip_gen: v7x
topology: tpu7x:2x2x1
jax: 0.10.0
libtpu: 0.0.40
codegen_flags: <defaults>
</compile_context>

<pallas_src>
import jax
import jax.numpy as jnp
from jax.experimental import pallas as pl
from jax.experimental.pallas import tpu as pltpu

# Contract the last dim of both operands: (A, D) x (B, D) -> (A, B).
_NT_DIMS = (((1,), (1,)), ((), ()))


def _node_contrastive_kernel(z2n_ref, z1_ref, idx_ref, loss_ref):
    # z2n : (C, D)   pre-normalized cluster rows, MXU dtype (bf16 or f32).
    # z1  : (TN, D)  node-embedding tile, native dtype (streamed).
    # idx : (1, TN)  int32 cluster assignment per node (lane-dense).
    # loss: (1, TN)  f32 output tile (lane-dense, unmasked store).
    z1 = z1_ref[...]                                             # (TN, D)
    z2n = z2n_ref[...]                                           # (C, D)
    idx = idx_ref[...]                                           # (1, TN)

    # Lane-dense (1, TN) squared norms via an MXU ones-row reduction (no
    # sublane->lane transpose). f32 square/accumulate regardless of input dtype.
    z1f = z1.astype(jnp.float32)
    ones_row = jnp.ones((1, z1f.shape[1]), dtype=jnp.float32)
    n1sq = jax.lax.dot_general(ones_row, z1f * z1f, _NT_DIMS,
                               preferred_element_type=jnp.float32)  # (1, TN)
    inv_n1 = jax.lax.rsqrt(jnp.maximum(n1sq, 1e-30))                # (1, TN)

    # Cosine similarity, transposed orientation: sT[c, n] = <z2n[c], z1[n]>/|z1[n]|.
    # Raw tile feeds the MXU (bf16 stays bf16); the node inverse-norm is folded
    # into the (C, TN) output (sublane broadcast), not pre-scaled over (TN, D).
    sT = jax.lax.dot_general(z2n, z1.astype(z2n.dtype), _NT_DIMS,
                             preferred_element_type=jnp.float32)    # (C, TN)
    sT = sT * inv_n1

    simT = jnp.exp(sT)                                              # (C, TN)
    row_sum = jnp.sum(simT, axis=0, keepdims=True)                  # (1, TN)

    # Dense one-hot mask (== sparse_coo_tensor(...).to_dense() of the original).
    c_iota = jax.lax.broadcasted_iota(jnp.int32, sT.shape, 0)       # (C, TN)
    s_pos = jnp.sum(jnp.where(c_iota == idx, sT, 0.0),
                    axis=0, keepdims=True)                          # (1, TN)

    # -log(pos / (pos + neg)) == log(sum_c exp(s)) - s_pos  (|cos| <= 1 -> safe)
    loss_ref[...] = jnp.log(row_sum) - s_pos


def _round_up(x, m):
    return ((x + m - 1) // m) * m


def _choose_row_tile(N, D, C, itemsize, vmem_limit_bytes):
    """Byte-targeted row-tile size (sized by bytes, not a row-count cap)."""
    fp32 = 4
    # Per-row VMEM footprint of one grid step, counting in-kernel temporaries:
    #   double-buffered streamed input + worst-case f32 cast/square temps
    #   + ~3 (C, tn) f32 intermediates + idx/loss lane vectors.
    per_row = 2 * D * itemsize + 2 * D * fp32 + 3 * C * fp32 + 16
    budget = vmem_limit_bytes // 2                                  # headroom
    max_rows_vmem = max(8, budget // per_row)
    max_rows_dma = max(8, (8 * 1024 * 1024) // (D * itemsize))      # <=8 MiB/step
    tn = min(max_rows_vmem, max_rows_dma)
    # Keep >= 4 tiles when there is enough work so "parallel" grid sharding
    # keeps both v7x TensorCores busy.
    if N >= 4 * 256:
        tn = min(tn, _round_up(pl.cdiv(N, 4), 256))
    # Granularity: prefer 256-row multiples (MXU cadence). When tiling is
    # required the (1, tn) idx/loss blocks are lane-dense, so tn must stay a
    # multiple of 128 -- no 256-row forcing for very wide D (v7x VMEM safety);
    # the per_row budget above bounds the total per-tile footprint explicitly.
    if tn >= 256:
        tn = (tn // 256) * 256
    else:
        tn = max(128, (tn // 128) * 128)
    return tn


def node_contrastive(node_embeds, cluster_embeds, cluster_indices):
    """Pallas implementation of NodeContrastive.forward (cosine / JS)."""
    N, D = node_embeds.shape
    C, D2 = cluster_embeds.shape
    assert D == D2

    # Pre-normalize clusters once in f32 (tiny C x D), then keep them in the
    # MXU dtype so bf16 node embeddings run a bf16 matmul (f32 accumulation).
    z2 = cluster_embeds.astype(jnp.float32)
    z2n = z2 * jax.lax.rsqrt(
        jnp.maximum(jnp.sum(z2 * z2, axis=-1, keepdims=True), 1e-30))
    mxu_dtype = (node_embeds.dtype
                 if node_embeds.dtype in (jnp.bfloat16, jnp.float32)
                 else jnp.float32)
    z2n = z2n.astype(mxu_dtype)

    idx = cluster_indices.astype(jnp.int32).reshape(1, N)

    # Per-generation VMEM limit: v5e/v6e (128 MiB physical) -> 96 MiB scoped,
    # v7x (64 MiB physical) -> 48 MiB, conservative 48 MiB on fallback.
    try:
        vmem_cap = int(getattr(pltpu.get_tpu_info(), "vmem_capacity_bytes",
                               64 * 1024 * 1024))
    except Exception:
        vmem_cap = 64 * 1024 * 1024
    vmem_limit = int(max(32 * 1024 * 1024,
                         min(96 * 1024 * 1024, (3 * vmem_cap) // 4)))

    itemsize = node_embeds.dtype.itemsize
    tn = _choose_row_tile(N, D, C, itemsize, vmem_limit)

    z1 = node_embeds
    if N <= tn:
        tn, n_pad = N, N                      # single tile == full array dims
    else:
        n_pad = pl.cdiv(N, tn) * tn
    if n_pad != N:
        z1 = jnp.pad(z1, ((0, n_pad - N), (0, 0)))
        idx = jnp.pad(idx, ((0, 0), (0, n_pad - N)))
    num_tiles = n_pad // tn

    loss = pl.pallas_call(
        _node_contrastive_kernel,
        out_shape=jax.ShapeDtypeStruct((1, n_pad), jnp.float32),
        grid=(num_tiles,),
        in_specs=[
            # Clusters: constant index_map -> resident across the grid.
            # (pipeline_mode=pl.Buffered(1) would drop its dead second buffer,
            #  but only saves C*D*itemsize bytes; omitted for robustness.)
            pl.BlockSpec((C, D), lambda i: (0, 0)),
            pl.BlockSpec((tn, D), lambda i: (i, 0)),      # node rows: streamed
            pl.BlockSpec((1, tn), lambda i: (0, i)),      # indices: lane-dense
        ],
        out_specs=pl.BlockSpec((1, tn), lambda i: (0, i)),  # lane-dense store
        compiler_params=pltpu.CompilerParams(
            dimension_semantics=("parallel",),
            vmem_limit_bytes=vmem_limit,
        ),
    )(z2n, z1, idx)
    return loss[0, :N]


def _reference(node_embeds, cluster_embeds, cluster_indices):
    z1 = node_embeds.astype(jnp.float32)
    z2 = cluster_embeds.astype(jnp.float32)
    n1 = jnp.linalg.norm(z1, axis=-1, keepdims=True)
    n2 = jnp.linalg.norm(z2, axis=-1, keepdims=True)
    sim = jnp.exp((z1 @ z2.T) / (n1 @ n2.T))
    pos_mask = jax.nn.one_hot(cluster_indices, z2.shape[0], dtype=jnp.float32)
    neg_mask = 1.0 - pos_mask
    pos = jnp.sum(sim * pos_mask, axis=-1)
    neg = jnp.sum(sim * neg_mask, axis=-1)
    return -jnp.log(pos / (pos + neg))


if __name__ == "__main__":
    key = jax.random.PRNGKey(0)
    k1, k2, k3 = jax.random.split(key, 3)

    # Small shapes consistent with the module: num_nodes, num_clusters, hidden.
    N, C, D = 16, 4, 32
    node_embeds = jax.random.normal(k1, (N, D), dtype=jnp.float32)
    cluster_embeds = jax.random.normal(k2, (C, D), dtype=jnp.float32)
    cluster_indices = jax.random.randint(k3, (N,), 0, C, dtype=jnp.int32)

    loss = jax.block_until_ready(
        node_contrastive(node_embeds, cluster_embeds, cluster_indices))
    ref = _reference(node_embeds, cluster_embeds, cluster_indices)
    assert loss.shape == (N,)
    assert jnp.allclose(loss, ref, rtol=1e-4, atol=1e-5), (loss, ref)

    # Exercise the tiled / padded multi-tile grid path as well.
    N2 = 3000
    k4, k5 = jax.random.split(k3)
    node2 = jax.random.normal(k4, (N2, D), dtype=jnp.float32)
    idx2 = jax.random.randint(k5, (N2,), 0, C, dtype=jnp.int32)
    loss2 = jax.block_until_ready(node_contrastive(node2, cluster_embeds, idx2))
    ref2 = _reference(node2, cluster_embeds, idx2)
    assert loss2.shape == (N2,)
    assert jnp.allclose(loss2, ref2, rtol=1e-4, atol=1e-5), (loss2, ref2)

    print("KERNEL_OK")
</pallas_src>

<mosaic_0001>
module attributes {stable_mosaic.version = 11 : i64} {
  func.func @_node_contrastive_kernel(%arg0: i32, %arg1: memref<4x32xf32, #tpu.memory_space<vmem>>, %arg2: memref<16x32xf32, #tpu.memory_space<vmem>>, %arg3: memref<1x16xi32, #tpu.memory_space<vmem>>, %arg4: memref<1x16xf32, #tpu.memory_space<vmem>>) attributes {dimension_semantics = [#tpu.dimension_semantics<parallel>], iteration_bounds = array<i64: 1>, scalar_prefetch = 0 : i64, scratch_operands = 0 : i64, tpu.core_type = #tpu.core_type<tc>, window_params = [{pipeline_mode = #tpu.pipeline_mode<synchronous>, transform_indices = @transform_0, window_bounds = array<i64: 4, 32>}, {transform_indices = @transform_1, window_bounds = array<i64: 16, 32>}, {transform_indices = @transform_2, window_bounds = array<i64: 1, 16>}, {transform_indices = @transform_3, window_bounds = array<i64: 1, 16>}]} {
    %c0 = arith.constant 0 : index
    %c0_0 = arith.constant 0 : index
    %0 = vector.load %arg2[%c0, %c0_0] : memref<16x32xf32, #tpu.memory_space<vmem>>, vector<16x32xf32>
    %c0_1 = arith.constant 0 : index
    %c0_2 = arith.constant 0 : index
    %1 = vector.load %arg1[%c0_1, %c0_2] : memref<4x32xf32, #tpu.memory_space<vmem>>, vector<4x32xf32>
    %c0_3 = arith.constant 0 : index
    %c0_4 = arith.constant 0 : index
    %2 = vector.load %arg3[%c0_3, %c0_4] : memref<1x16xi32, #tpu.memory_space<vmem>>, vector<1x16xi32>
    %cst = arith.constant 1.000000e+00 : f32
    %3 = vector.broadcast %cst : f32 to vector<1x32xf32>
    %4 = arith.mulf %0, %0 : vector<16x32xf32>
    %cst_5 = arith.constant dense<0.000000e+00> : vector<1x16xf32>
    %5 = tpu.matmul %3, %4, %cst_5 {dimension_numbers = #tpu.dot_dimension_numbers<[1], [1], [0], [0], [0, 0, 1, 0], [], []>} : vector<1x32xf32>, vector<16x32xf32>, vector<1x16xf32> -> vector<1x16xf32>
    %cst_6 = arith.constant 1.000000e-30 : f32
    %6 = vector.broadcast %cst_6 : f32 to vector<1x16xf32>
    %7 = arith.maximumf %5, %6 : vector<1x16xf32>
    %8 = math.rsqrt %7 : vector<1x16xf32>
    %cst_7 = arith.constant dense<0.000000e+00> : vector<4x16xf32>
    %9 = tpu.matmul %1, %0, %cst_7 {dimension_numbers = #tpu.dot_dimension_numbers<[1], [1], [0], [0], [0, 0, 1, 0], [], []>} : vector<4x32xf32>, vector<16x32xf32>, vector<4x16xf32> -> vector<4x16xf32>
    %10 = vector.broadcast %8 : vector<1x16xf32> to vector<4x16xf32>
    %11 = arith.mulf %9, %10 : vector<4x16xf32>
    %12 = math.exp %11 : vector<4x16xf32>
    %cst_8 = arith.constant dense<0.000000e+00> : vector<16xf32>
    %13 = vector.multi_reduction <add>, %12, %cst_8 [0] : vector<4x16xf32> to vector<16xf32>
    %14 = vector.shape_cast %13 : vector<16xf32> to vector<1x16xf32>
    %15 = tpu.iota {dimensions = array<i32: 0>} : vector<4x16xi32>
    %16 = vector.broadcast %2 : vector<1x16xi32> to vector<4x16xi32>
    %17 = arith.cmpi eq, %15, %16 : vector<4x16xi32>
    %cst_9 = arith.constant 0.000000e+00 : f32
    %18 = vector.broadcast %cst_9 : f32 to vector<4x16xf32>
    %19 = arith.select %17, %11, %18 : vector<4x16xi1>, vector<4x16xf32>
    %cst_10 = arith.constant dense<0.000000e+00> : vector<16xf32>
    %20 = vector.multi_reduction <add>, %19, %cst_10 [0] : vector<4x16xf32> to vector<16xf32>
    %21 = vector.shape_cast %20 : vector<16xf32> to vector<1x16xf32>
    %22 = math.log %14 : vector<1x16xf32>
    %23 = arith.subf %22, %21 : vector<1x16xf32>
    %c0_11 = arith.constant 0 : index
    %c0_12 = arith.constant 0 : index
    %24 = vector.load %arg4[%c0_11, %c0_12] : memref<1x16xf32, #tpu.memory_space<vmem>>, vector<1x16xf32>
    tpu.vector_store %arg4[%c0_11, %c0_12], %23 {strides = array<i32>} : memref<1x16xf32, #tpu.memory_space<vmem>>, vector<1x16xf32>,
    return
  }
  func.func @transform_0(%arg0: i32) -> (i32, i32) {
    %c0_i32 = arith.constant 0 : i32
    %c0_i32_0 = arith.constant 0 : i32
    %c0_i32_1 = arith.constant 0 : i32
    return %c0_i32, %c0_i32_0 : i32, i32
  }
  func.func @transform_1(%arg0: i32) -> (i32, i32) {
    %c0_i32 = arith.constant 0 : i32
    %c0_i32_0 = arith.constant 0 : i32
    return %arg0, %c0_i32 : i32, i32
  }
  func.func @transform_2(%arg0: i32) -> (i32, i32) {
    %c0_i32 = arith.constant 0 : i32
    %c0_i32_0 = arith.constant 0 : i32
    return %c0_i32, %arg0 : i32, i32
  }
  func.func @transform_3(%arg0: i32) -> (i32, i32) {
    %c0_i32 = arith.constant 0 : i32
    %c0_i32_0 = arith.constant 0 : i32
    return %c0_i32, %arg0 : i32, i32
  }
}

</mosaic_0001>

<llo_original>
// kernel: tpu_custom_call.1
$region0: #{tpu_custom_call.1}
  #allocation0 [shape = 'u32[]', space=smem, size = 0x4, offset = 0x4, fixed_abs, tag = 'smem constant byte address 0x4 - core index']
  #allocation1 [shape = 'u32[144,128]{1,0:T(1,128)}', space=vmem, size = 0x12000, scoped, tag = 'internal scratch']
  %s0 = inlined_call_operand.hbm [shape: f32[4,32], index: 0, kind: input, shape index: {}]
  %s1 = inlined_call_operand.hbm [shape: f32[16,32], index: 1, kind: input, shape index: {}]
  %s2 = inlined_call_operand.vmem [shape: s32[1,16], index: 2, kind: input, shape index: {}]
  %s3 = inlined_call_operand.hbm [shape: f32[1,16], index: 3, kind: output, shape index: {}]
  %s4 = sld [smem:[#allocation0]]
  $region30: #{tpu_custom_call.1} parent=0
    _
  %s6 = ssub.s32 1, %s4
  %s7 = scalar_select 0, %s6, %s4
  $region1: #{tpu_custom_call.1} parent=0
    #allocation2 [shape = 'u8[2048]{0}', space=vmem, size = 0x800, scoped, tag = 'input window, operand 0, single buffered']
    #allocation3 [shape = 's32[1]{0}', space=sflag, size = 0x4, scoped, tag = 'scoped memory for tpu_custom_call.1']
    #allocation4 [shape = 's32[1]{0}', space=sflag, size = 0x4, scoped, tag = 'scoped memory for tpu_custom_call.1']
    #allocation5 [shape = 'u8[8192]{0}', space=vmem, size = 0x2000, scoped, tag = 'input window, operand 1, single buffered']
    #allocation6 [shape = 's32[1]{0}', space=sflag, size = 0x4, scoped, tag = 'scoped memory for tpu_custom_call.1']
    #allocation7 [shape = 'u8[512]{0}', space=vmem, size = 0x400, scoped, tag = 'output window, operand 0, single buffered']
    %8 = vsyncpa [#allocation3], 0
    %9 = vsyncpa [#allocation6], 0
    %10 = vsyncpa [#allocation4], 0
    // Predicated region
    $region2: #{tpu_custom_call.1} parent=1 // pred_check
      _
    $region3: #{tpu_custom_call.1} parent=1 // pred_check_branch
      %12 = sbr.rel (0) target = $region5
    $region4: #{tpu_custom_call.1} parent=1 // pred_region
      %s14 = ssub.s32 64, 64
      %15 = vsyncadd [#allocation3], %s14
      %s17 = sshll.u32 [#allocation2], 4
      %s18 = int_to_ptr.vmem [resolvable:$true] %s17
      %20 = dma.hbm_to_vmem [thread:$0]  %s0, 64, %s18, [#allocation3]
    $region5: #{tpu_custom_call.1} parent=1 // pred_fallthru
      _
    // Predicated region
    $region6: #{tpu_custom_call.1} parent=1 // pred_check
      _
    $region7: #{tpu_custom_call.1} parent=1 // pred_check_branch
      %22 = sbr.rel (0) target = $region9
    $region8: #{tpu_custom_call.1} parent=1 // pred_region
      %s24 = ssub.s32 256, 256
      %25 = vsyncadd [#allocation6], %s24
      %s26 = sshll.u32 [#allocation5], 4
      %s27 = int_to_ptr.vmem [resolvable:$true] %s26
      %32 = dma.hbm_to_vmem [thread:$0]  %s1, 256, %s27, [#allocation6], 128, 128, 8
    $region9: #{tpu_custom_call.1} parent=1 // pred_fallthru
      _
    // Predicated region
    $region10: #{tpu_custom_call.1} parent=1 // pred_check
      _
    $region11: #{tpu_custom_call.1} parent=1 // pred_check_branch
      %34 = sbr.rel (0) target = $region13
    $region12: #{tpu_custom_call.1} parent=1 // pred_region
      _
    $region13: #{tpu_custom_call.1} parent=1 // pred_fallthru
      _
    // Predicated region
    $region14: #{tpu_custom_call.1} parent=1 // pred_check
      _
    $region15: #{tpu_custom_call.1} parent=1 // pred_check_branch
      %36 = sbr.rel (0) target = $region17
    $region16: #{tpu_custom_call.1} parent=1 // pred_region
      %37 = dma.done [#allocation3], 64
    $region17: #{tpu_custom_call.1} parent=1 // pred_fallthru
      _
    // Predicated region
    $region18: #{tpu_custom_call.1} parent=1 // pred_check
      _
    $region19: #{tpu_custom_call.1} parent=1 // pred_check_branch
      %39 = sbr.rel (0) target = $region21
    $region20: #{tpu_custom_call.1} parent=1 // pred_region
      %40 = dma.done [#allocation6], 256
    $region21: #{tpu_custom_call.1} parent=1 // pred_fallthru
      _
    %v41 = vld [vmem:[#allocation5] sm:$0xff]
    %v42 = vld [vmem:[#allocation5 + $0x8] sm:$0xff]
    %v43 = vld [vmem:[#allocation2] sm:$0xf]
    %v44 = vld [vmem:[%s2] sm:$0x1]
    %v45 = vmul.f32 %v41, %v41
    %v46 = vmul.f32 %v42, %v42
    %vm47 = vcmask 261120
    %v49 = vsel %vm47, 1.0, 0
    %v52 = vsel %vm47, %v45, 0
    %v55 = vsel %vm47, %v46, 0
    %57 = vmatprep.subr.mxu0 0.0
    %58 = vmatpush1.xpose.msra.mxu0 %v52
    %59 = vmatprep.subr.mxu0 0.0
    %60 = vmatpush1.xpose.msra.mxu0 %v55
    %61 = vmatprep.subr.mxu0 0.0
    %62 = vmatpush1.xpose.msra.mxu0 0.0
    %63 = vmatprep.subr.mxu0 0.0
    %64 = vmatpush1.xpose.msra.mxu0 0.0
    %65 = vmatprep.subr.mxu0 0.0
    %66 = vmatpush1.xpose.msra.mxu0 0.0
    %67 = vmatprep.subr.mxu0 0.0
    %68 = vmatpush1.xpose.msra.mxu0 0.0
    %69 = vmatprep.subr.mxu0 0.0
    %70 = vmatpush1.xpose.msra.mxu0 0.0
    %71 = vmatprep.subr.mxu0 0.0
    %72 = vmatpush1.xpose.msra.mxu0 0.0
    %73 = vmatprep.subr.mxu0 0.0
    %74 = vmatpush1.xpose.msra.mxu0 0.0
    %75 = vmatprep.subr.mxu0 0.0
    %76 = vmatpush1.xpose.msra.mxu0 0.0
    %77 = vmatprep.subr.mxu0 0.0
    %78 = vmatpush1.xpose.msra.mxu0 0.0
    %79 = vmatprep.subr.mxu0 0.0
    %80 = vmatpush1.xpose.msra.mxu0 0.0
    %81 = vmatprep.subr.mxu0 0.0
    %82 = vmatpush1.xpose.msra.mxu0 0.0
    %83 = vmatprep.subr.mxu0 0.0
    %84 = vmatpush1.xpose.msra.mxu0 0.0
    %85 = vmatprep.subr.mxu0 0.0
    %86 = vmatpush1.xpose.msra.mxu0 0.0
    %87 = vmatprep.subr.mxu0 0.0
    %88 = vmatpush1.xpose.msra.mxu0 0.0
    %89 = vmatprep.subr.mxu0 0.0
    %90 = vmatpush1.xpose.msra.mxu0 0.0
    %91 = vmatprep.subr.mxu0 0.0
    %92 = vmatpush1.xpose.msra.mxu0 0.0
    %93 = vmatprep.subr.mxu0 0.0
    %94 = vmatpush1.xpose.msra.mxu0 0.0
    %95 = vmatprep.subr.mxu0 0.0
    %96 = vmatpush1.xpose.msra.mxu0 0.0
    %97 = vmatprep.subr.mxu0 0.0
    %98 = vmatpush1.xpose.msra.mxu0 0.0
    %99 = vmatprep.subr.mxu0 0.0
    %100 = vmatpush1.xpose.msra.mxu0 0.0
    %101 = vmatprep.subr.mxu0 0.0
    %102 = vmatpush1.xpose.msra.mxu0 0.0
    %103 = vmatprep.subr.mxu0 0.0
    %104 = vmatpush1.xpose.msra.mxu0 0.0
    %105 = vmatprep.subr.mxu0 0.0
    %106 = vmatpush1.xpose.msra.mxu0 0.0
    %107 = vmatprep.subr.mxu0 0.0
    %108 = vmatpush1.xpose.msra.mxu0 0.0
    %109 = vmatprep.subr.mxu0 0.0
    %110 = vmatpush1.xpose.msra.mxu0 0.0
    %111 = vmatprep.subr.mxu0 0.0
    %112 = vmatpush1.xpose.msra.mxu0 0.0
    %113 = vmatprep.subr.mxu0 0.0
    %114 = vmatpush1.xpose.msra.mxu0 0.0
    %115 = vmatprep.subr.mxu0 0.0
    %116 = vmatpush1.xpose.msra.mxu0 0.0
    %117 = vmatprep.subr.mxu0 0.0
    %118 = vmatpush1.xpose.msra.mxu0 0.0
    %119 = vmatprep.subr.mxu0 0.0
    %120 = vmatpush1.xpose.msra.mxu0 0.0
    %121 = vmatprep.mubr.f32.mxu0 0.0
    %122 = vmatmul.mubr.f32.gmra.mrb[0].mxu0 %v49
    %v123 = vpop.f32.mrb[0].mxu0
    %v124 = vadd.f32 0.0, %v123
    %v125 = vpop.f32.mrb[0].mxu0
    %126 = vdwg.mxu0
    %v127 = vmax.f32 %v124, 1e-30
    %v128 = vrsqrt.pop %v127
    %v130 = vsel %vm47, %v43, 0
    %v133 = vsel %vm47, %v41, 0
    %v136 = vsel %vm47, %v42, 0
    %138 = vmatprep.subr.mxu0 0.0
    %139 = vmatpush1.xpose.msra.mxu0 %v133
    %140 = vmatprep.subr.mxu0 0.0
    %141 = vmatpush1.xpose.msra.mxu0 %v136
    %142 = vmatprep.subr.mxu0 0.0
    %143 = vmatpush1.xpose.msra.mxu0 0.0
    %144 = vmatprep.subr.mxu0 0.0
    %145 = vmatpush1.xpose.msra.mxu0 0.0
    %146 = vmatprep.subr.mxu0 0.0
    %147 = vmatpush1.xpose.msra.mxu0 0.0
    %148 = vmatprep.subr.mxu0 0.0
    %149 = vmatpush1.xpose.msra.mxu0 0.0
    %150 = vmatprep.subr.mxu0 0.0
    %151 = vmatpush1.xpose.msra.mxu0 0.0
    %152 = vmatprep.subr.mxu0 0.0
    %153 = vmatpush1.xpose.msra.mxu0 0.0
    %154 = vmatprep.subr.mxu0 0.0
    %155 = vmatpush1.xpose.msra.mxu0 0.0
    %156 = vmatprep.subr.mxu0 0.0
    %157 = vmatpush1.xpose.msra.mxu0 0.0
    %158 = vmatprep.subr.mxu0 0.0
    %159 = vmatpush1.xpose.msra.mxu0 0.0
    %160 = vmatprep.subr.mxu0 0.0
    %161 = vmatpush1.xpose.msra.mxu0 0.0
    %162 = vmatprep.subr.mxu0 0.0
    %163 = vmatpush1.xpose.msra.mxu0 0.0
    %164 = vmatprep.subr.mxu0 0.0
    %165 = vmatpush1.xpose.msra.mxu0 0.0
    %166 = vmatprep.subr.mxu0 0.0
    %167 = vmatpush1.xpose.msra.mxu0 0.0
    %168 = vmatprep.subr.mxu0 0.0
    %169 = vmatpush1.xpose.msra.mxu0 0.0
    %170 = vmatprep.subr.mxu0 0.0
    %171 = vmatpush1.xpose.msra.mxu0 0.0
    %172 = vmatprep.subr.mxu0 0.0
    %173 = vmatpush1.xpose.msra.mxu0 0.0
    %174 = vmatprep.subr.mxu0 0.0
    %175 = vmatpush1.xpose.msra.mxu0 0.0
    %176 = vmatprep.subr.mxu0 0.0
    %177 = vmatpush1.xpose.msra.mxu0 0.0
    %178 = vmatprep.subr.mxu0 0.0
    %179 = vmatpush1.xpose.msra.mxu0 0.0
    %180 = vmatprep.subr.mxu0 0.0
    %181 = vmatpush1.xpose.msra.mxu0 0.0
    %182 = vmatprep.subr.mxu0 0.0
    %183 = vmatpush1.xpose.msra.mxu0 0.0
    %184 = vmatprep.subr.mxu0 0.0
    %185 = vmatpush1.xpose.msra.mxu0 0.0
    %186 = vmatprep.subr.mxu0 0.0
    %187 = vmatpush1.xpose.msra.mxu0 0.0
    %188 = vmatprep.subr.mxu0 0.0
    %189 = vmatpush1.xpose.msra.mxu0 0.0
    %190 = vmatprep.subr.mxu0 0.0
    %191 = vmatpush1.xpose.msra.mxu0 0.0
    %192 = vmatprep.subr.mxu0 0.0
    %193 = vmatpush1.xpose.msra.mxu0 0.0
    %194 = vmatprep.subr.mxu0 0.0
    %195 = vmatpush1.xpose.msra.mxu0 0.0
    %196 = vmatprep.subr.mxu0 0.0
    %197 = vmatpush1.xpose.msra.mxu0 0.0
    %198 = vmatprep.subr.mxu0 0.0
    %199 = vmatpush1.xpose.msra.mxu0 0.0
    %200 = vmatprep.subr.mxu0 0.0
    %201 = vmatpush1.xpose.msra.mxu0 0.0
    %202 = vmatprep.mubr.f32.mxu0 0.0
    %203 = vmatmul.mubr.f32.gmra.mrb[0].mxu0 %v130
    %v204 = vpop.f32.mrb[0].mxu0
    %v205 = vadd.f32 0.0, %v204
    %v206 = vpop.f32.mrb[0].mxu0
    %207 = vdwg.mxu0
    %v208 = vlaneseq
    %v209 = vshrl.u32 %v208, 7
    %v210 = vsub.s32 0, %v209
    %v211 = vrot.slane %v128, %v210
    %v212 = vmul.f32 %v205, %v211
    %v213 = vmul.f32 %v212, 1.442695
    %v214 = vpow.pop %v213
    %vm215 = vcmask 125952
    %v216 = vsel %vm215, %v214, 0.0
    %v217 = vrot.slane %v216, 4
    %v218 = vadd.f32 %v216, %v217
    %v219 = vrot.slane %v218, 2
    %v220 = vadd.f32 %v218, %v219
    %v221 = vrot.slane %v220, 1
    %v222 = vadd.f32 %v220, %v221
    %v223 = vlaneseq
    %v224 = vshrl.u32 %v223, 7
    %v225 = vlaneseq
    %v226 = vshrl.u32 %v225, 7
    %v227 = vsub.s32 0, %v226
    %v228 = vrot.slane %v44, %v227
    %vm229 = vcmp.eq.s32.totalorder %v224, %v228
    %v230 = vsel %vm229, %v212, 0.0
    %v231 = vsel %vm215, %v230, 0.0
    %v232 = vrot.slane %v231, 4
    %v233 = vadd.f32 %v231, %v232
    %v234 = vrot.slane %v233, 2
    %v235 = vadd.f32 %v233, %v234
    %v236 = vrot.slane %v235, 1
    %v237 = vadd.f32 %v235, %v236
    %v238 = vlog2.pop %v222
    %v239 = vmul.f32 %v238, 0.6931472
    %v240 = vsub.f32 %v239, %v237
    %vm241 = vcmask 122880
    %242 = vst.msk [vmem:[#allocation7] sm:$0x1] %vm241, %v240
    // Predicated region
    $region22: #{tpu_custom_call.1} parent=1 // pred_check
      _
    $region23: #{tpu_custom_call.1} parent=1 // pred_check_branch
      %244 = sbr.rel (0) target = $region25
    $region24: #{tpu_custom_call.1} parent=1 // pred_region
      %s246 = ssub.s32 16, 16
      %247 = vsyncadd [#allocation4], %s246
      %s249 = sshll.u32 [#allocation7], 4
      %s250 = int_to_ptr.vmem [resolvable:$true] %s249
      %252 = dma.vmem_to_hbm [thread:$0]  %s250, 16, %s3, [#allocation4]
    $region25: #{tpu_custom_call.1} parent=1 // pred_fallthru
      _
    // Predicated region
    $region26: #{tpu_custom_call.1} parent=1 // pred_check
      _
    $region27: #{tpu_custom_call.1} parent=1 // pred_check_branch
      %254 = sbr.rel (0) target = $region29
    $region28: #{tpu_custom_call.1} parent=1 // pred_region
      %255 = dma.done [#allocation4], 16
    $region29: #{tpu_custom_call.1} parent=1 // pred_fallthru
      _
    %256 = vsyncpa [#allocation3], 1
    %257 = vsyncpa [#allocation6], 1
    %258 = vsyncpa [#allocation4], 1

</llo_original>
